<compile_context>
chip_gen: v6e
topology: v6e:2x2x1
jax: 0.10.0
libtpu: 0.0.40
codegen_flags: <defaults>
</compile_context>

<pallas_src>
import jax
import jax.numpy as jnp
import numpy as np
from jax.experimental import pallas as pl
from jax.experimental.pallas import tpu as pltpu

INPUT_DIM = 14
OUTPUT_DIM = 4
HIDDEN = (256, 128, 64)
DIMS = (INPUT_DIM,) + HIDDEN + (OUTPUT_DIM,)

# Per-grid-step fixed overhead (~0.35 us) dominates at small tiles, so use big
# balanced batch tiles.  At TILE_CAP=4096 rows live VMEM is ~12 MB (h1 f32 is
# 4 MB), comfortably inside the limit on v5e/v6e (128 MiB) and v7x (64 MiB).
TILE_CAP = 4096
# Once the batch has at least this many rows, force an even grid >= 2 so the
# "parallel" batch axis shards across v7x's two TensorCores (one extra ~0.35 us
# step on single-TC chips; negligible).
FORCE_SPLIT_ROWS = 1024
VMEM_LIMIT_BYTES = 48 * 1024 * 1024  # < v7x's 64 MiB physical; ample headroom elsewhere

_ALLOWED_X_DTYPES = (np.dtype(jnp.float32), np.dtype(jnp.bfloat16))
_SINGLE_BUFFER_RESIDENT = hasattr(pl, "Buffered")


def dqn_kernel(x_ref, w1_ref, w2_ref, w3_ref, w4_ref, bias_ref, out_ref):
    # x tile (f32 or bf16) -> bf16 for the MXU; accumulate in f32; bias/ReLU in
    # f32; intermediates stored back as bf16 (fused maximum+astype).
    x = x_ref[...].astype(jnp.bfloat16)

    # Packed biases: one (4, 256) f32 buffer, row i = layer i's bias.
    # NOTE(review): b3/b4 are sub-lane-width slices (masked loads); a few ops
    # per step, deferred until the structural items show it on the bundle.
    b1 = bias_ref[0:1, 0:HIDDEN[0]]      # (1, 256)
    b2 = bias_ref[1:2, 0:HIDDEN[1]]      # (1, 128)
    b3 = bias_ref[2:3, 0:HIDDEN[2]]      # (1, 64)
    b4 = bias_ref[3:4, 0:OUTPUT_DIM]     # (1, 4)

    h1 = jnp.dot(x, w1_ref[...], preferred_element_type=jnp.float32) + b1
    h1 = jnp.maximum(h1, 0.0).astype(jnp.bfloat16)

    h2 = jnp.dot(h1, w2_ref[...], preferred_element_type=jnp.float32) + b2
    h2 = jnp.maximum(h2, 0.0).astype(jnp.bfloat16)

    h3 = jnp.dot(h2, w3_ref[...], preferred_element_type=jnp.float32) + b3
    h3 = jnp.maximum(h3, 0.0).astype(jnp.bfloat16)

    out = jnp.dot(h3, w4_ref[...], preferred_element_type=jnp.float32) + b4
    out_ref[...] = out.astype(out_ref.dtype)


def pack_params(params):
    """Per-layer f32 (w, b) -> kernel layout: bf16 weights (in, out) plus one
    (4, 256) f32 packed-bias buffer."""
    ws = tuple(w.astype(jnp.bfloat16) for w, _ in params)
    bias_pack = jnp.zeros((4, HIDDEN[0]), dtype=jnp.float32)
    for i, (_, b) in enumerate(params):
        bias_pack = bias_pack.at[i, : b.shape[-1]].set(b.reshape(-1))
    return ws, bias_pack


def _round_up(x, m):
    return ((x + m - 1) // m) * m


def _choose_tiling(batch, tile_cap):
    """Balanced batch tiles: tb is a multiple of 8, grid steps are as equal as
    possible, and padding is confined to the masked tail of the final block."""
    tile_cap = max(8, _round_up(int(tile_cap), 8))   # defensive: keep (8,128) rule
    b8 = _round_up(batch, 8)
    g = pl.cdiv(b8, tile_cap)
    if b8 >= FORCE_SPLIT_ROWS:
        g = max(g, 2)
        g += g % 2                                   # even grid -> balanced on 2 TCs
    tb = _round_up(pl.cdiv(b8, g), 8)                # balanced tile, multiple of 8
    grid = pl.cdiv(batch, tb)
    return tb, grid


def _resident_spec(shape, single_buffer):
    """Weights/biases: constant index_map => VMEM-resident across grid steps.
    Single-buffer them when supported (double-buffering them is pure waste)."""
    if single_buffer:
        return pl.BlockSpec(shape, lambda i: (0, 0),
                            pipeline_mode=pl.Buffered(buffer_count=1))
    return pl.BlockSpec(shape, lambda i: (0, 0))


def _run_pallas(x, ws, bias_pack, tb, grid, single_buffer):
    w1, w2, w3, w4 = ws
    batch = x.shape[0]
    rows = tb * grid
    flops = 2 * rows * sum(a * b for a, b in zip(DIMS[:-1], DIMS[1:]))
    bytes_accessed = (
        sum(int(np.prod(w.shape)) for w in ws) * 2           # bf16 weights
        + int(np.prod(bias_pack.shape)) * 4
        + batch * INPUT_DIM * x.dtype.itemsize
        + batch * OUTPUT_DIM * 4
    )
    return pl.pallas_call(
        dqn_kernel,
        out_shape=jax.ShapeDtypeStruct((batch, OUTPUT_DIM), jnp.float32),
        grid=(grid,),
        in_specs=[
            pl.BlockSpec((tb, INPUT_DIM), lambda i: (i, 0)),          # x tile
            _resident_spec((INPUT_DIM, HIDDEN[0]), single_buffer),    # w1
            _resident_spec((HIDDEN[0], HIDDEN[1]), single_buffer),    # w2
            _resident_spec((HIDDEN[1], HIDDEN[2]), single_buffer),    # w3
            _resident_spec((HIDDEN[2], OUTPUT_DIM), single_buffer),   # w4
            _resident_spec(bias_pack.shape, single_buffer),           # packed biases
        ],
        out_specs=pl.BlockSpec((tb, OUTPUT_DIM), lambda i: (i, 0)),
        compiler_params=pltpu.CompilerParams(
            dimension_semantics=("parallel",),
            vmem_limit_bytes=VMEM_LIMIT_BYTES,
        ),
        cost_estimate=pl.CostEstimate(
            flops=flops, transcendentals=0, bytes_accessed=bytes_accessed
        ),
    )(x, w1, w2, w3, w4, bias_pack)


def dqn_forward(x, kernel_params, *, tile_cap=TILE_CAP):
    """Forward pass of the DQN. x: (B, 14) or (14,), f32 or bf16."""
    global _SINGLE_BUFFER_RESIDENT
    ws, bias_pack = kernel_params

    if x.ndim == 1:
        x = x[None, :]                       # mirror PyTorch's unsqueeze(0)
    if x.dtype not in _ALLOWED_X_DTYPES:
        x = x.astype(jnp.float32)            # accept f32 or bf16 activations as-is

    batch = x.shape[0]
    tb, grid = _choose_tiling(batch, tile_cap)

    try:
        return _run_pallas(x, ws, bias_pack, tb, grid, _SINGLE_BUFFER_RESIDENT)
    except Exception:
        if not _SINGLE_BUFFER_RESIDENT:
            raise
        # jax version without pipeline_mode support on TPU pallas_call:
        # fall back to default (double-buffered) resident specs.
        _SINGLE_BUFFER_RESIDENT = False
        return _run_pallas(x, ws, bias_pack, tb, grid, False)


def init_params(seed=0):
    """Deterministic init matching PyTorch Linear's U(-1/sqrt(fan_in), +1/sqrt(fan_in)).
    Weights stored as (in, out) so the kernel computes x @ W (== x @ W.T in PyTorch)."""
    key = jax.random.PRNGKey(seed)
    params = []
    for fan_in, fan_out in zip(DIMS[:-1], DIMS[1:]):
        key, kw, kb = jax.random.split(key, 3)
        bound = 1.0 / np.sqrt(fan_in)
        w = jax.random.uniform(kw, (fan_in, fan_out), jnp.float32, -bound, bound)
        b = jax.random.uniform(kb, (fan_out,), jnp.float32, -bound, bound)
        params.append((w, b))
    return params


def dqn_reference(x, params):
    """Pure-JAX reference matching the kernel's numerics (bf16 matmul, f32 accumulate)."""
    if x.ndim == 1:
        x = x[None, :]
    h = x.astype(jnp.float32)
    n = len(params)
    for idx, (w, b) in enumerate(params):
        h = jnp.dot(h.astype(jnp.bfloat16), w.astype(jnp.bfloat16),
                    preferred_element_type=jnp.float32) + b[None, :]
        if idx < n - 1:
            h = jnp.maximum(h, 0.0)
    return h


if __name__ == "__main__":
    params = init_params(seed=0)
    kparams = pack_params(params)

    def check(x, **kw):
        out = jax.block_until_ready(dqn_forward(x, kparams, **kw))
        ref = dqn_reference(x, params)
        np.testing.assert_allclose(np.asarray(out), np.asarray(ref),
                                   rtol=1e-2, atol=1e-2)
        return out

    key = jax.random.PRNGKey(0)
    k1, k2, k3, k4, k5 = jax.random.split(key, 5)

    # Sublane-aligned small batch: single balanced tile, no padding.
    check(jax.random.normal(k1, (8, INPUT_DIM), dtype=jnp.float32))

    # Ragged batch (B % 8 != 0): masked final block, no wrapper-side jnp.pad.
    check(jax.random.normal(k2, (5, INPUT_DIM), dtype=jnp.float32))

    # 1-D input path (PyTorch's x.dim() == 1 branch).
    out1 = check(jax.random.normal(k3, (INPUT_DIM,), dtype=jnp.float32))
    assert out1.shape == (1, OUTPUT_DIM)

    # Previously padded 600 -> 1024; now runs as one balanced 600-row tile.
    check(jax.random.normal(k4, (600, INPUT_DIM), dtype=jnp.float32))

    # Larger batch: forced even grid (2 x 768-row tiles) so both v7x TCs work;
    # also exercises the bf16-activation input path.
    xb = jax.random.normal(k5, (1536, INPUT_DIM), dtype=jnp.float32)
    check(xb)
    check(xb.astype(jnp.bfloat16))

    print("KERNEL_OK")
</pallas_src>

<mosaic_0001>
module attributes {stable_mosaic.version = 11 : i64} {
  func.func @dqn_kernel(%arg0: i32, %arg1: memref<8x14xf32, #tpu.memory_space<vmem>>, %arg2: memref<14x256xbf16, #tpu.memory_space<vmem>>, %arg3: memref<256x128xbf16, #tpu.memory_space<vmem>>, %arg4: memref<128x64xbf16, #tpu.memory_space<vmem>>, %arg5: memref<64x4xbf16, #tpu.memory_space<vmem>>, %arg6: memref<4x256xf32, #tpu.memory_space<vmem>>, %arg7: memref<8x4xf32, #tpu.memory_space<vmem>>) attributes {dimension_semantics = [#tpu.dimension_semantics<parallel>], iteration_bounds = array<i64: 1>, scalar_prefetch = 0 : i64, scratch_operands = 0 : i64, tpu.core_type = #tpu.core_type<tc>, window_params = [{transform_indices = @transform_0, window_bounds = array<i64: 8, 14>}, {pipeline_mode = #tpu.pipeline_mode<synchronous>, transform_indices = @transform_1, window_bounds = array<i64: 14, 256>}, {pipeline_mode = #tpu.pipeline_mode<synchronous>, transform_indices = @transform_2, window_bounds = array<i64: 256, 128>}, {pipeline_mode = #tpu.pipeline_mode<synchronous>, transform_indices = @transform_3, window_bounds = array<i64: 128, 64>}, {pipeline_mode = #tpu.pipeline_mode<synchronous>, transform_indices = @transform_4, window_bounds = array<i64: 64, 4>}, {pipeline_mode = #tpu.pipeline_mode<synchronous>, transform_indices = @transform_5, window_bounds = array<i64: 4, 256>}, {transform_indices = @transform_6, window_bounds = array<i64: 8, 4>}]} {
    %c0 = arith.constant 0 : index
    %c0_0 = arith.constant 0 : index
    %0 = vector.load %arg1[%c0, %c0_0] : memref<8x14xf32, #tpu.memory_space<vmem>>, vector<8x14xf32>
    %1 = arith.truncf %0 : vector<8x14xf32> to vector<8x14xbf16>
    %c0_1 = arith.constant 0 : index
    %c0_2 = arith.constant 0 : index
    %2 = vector.load %arg6[%c0_1, %c0_2] : memref<4x256xf32, #tpu.memory_space<vmem>>, vector<1x256xf32>
    %c1 = arith.constant 1 : index
    %c0_3 = arith.constant 0 : index
    %3 = vector.load %arg6[%c1, %c0_3] : memref<4x256xf32, #tpu.memory_space<vmem>>, vector<1x128xf32>
    %c2 = arith.constant 2 : index
    %c0_4 = arith.constant 0 : index
    %4 = vector.load %arg6[%c2, %c0_4] : memref<4x256xf32, #tpu.memory_space<vmem>>, vector<1x64xf32>
    %c3 = arith.constant 3 : index
    %c0_5 = arith.constant 0 : index
    %5 = vector.load %arg6[%c3, %c0_5] : memref<4x256xf32, #tpu.memory_space<vmem>>, vector<1x4xf32>
    %c0_6 = arith.constant 0 : index
    %c0_7 = arith.constant 0 : index
    %6 = vector.load %arg2[%c0_6, %c0_7] : memref<14x256xbf16, #tpu.memory_space<vmem>>, vector<14x256xbf16>
    %cst = arith.constant dense<0.000000e+00> : vector<8x256xf32>
    %7 = tpu.matmul %1, %6, %cst {dimension_numbers = #tpu.dot_dimension_numbers<[1], [0], [0], [1], [0, 0, 1, 1], [], []>} : vector<8x14xbf16>, vector<14x256xbf16>, vector<8x256xf32> -> vector<8x256xf32>
    %8 = vector.broadcast %2 : vector<1x256xf32> to vector<8x256xf32>
    %9 = arith.addf %7, %8 : vector<8x256xf32>
    %cst_8 = arith.constant 0.000000e+00 : f32
    %10 = vector.broadcast %cst_8 : f32 to vector<8x256xf32>
    %11 = arith.maximumf %9, %10 : vector<8x256xf32>
    %12 = arith.truncf %11 : vector<8x256xf32> to vector<8x256xbf16>
    %c0_9 = arith.constant 0 : index
    %c0_10 = arith.constant 0 : index
    %13 = vector.load %arg3[%c0_9, %c0_10] : memref<256x128xbf16, #tpu.memory_space<vmem>>, vector<256x128xbf16>
    %cst_11 = arith.constant dense<0.000000e+00> : vector<8x128xf32>
    %14 = tpu.matmul %12, %13, %cst_11 {dimension_numbers = #tpu.dot_dimension_numbers<[1], [0], [0], [1], [0, 0, 1, 1], [], []>} : vector<8x256xbf16>, vector<256x128xbf16>, vector<8x128xf32> -> vector<8x128xf32>
    %15 = vector.broadcast %3 : vector<1x128xf32> to vector<8x128xf32>
    %16 = arith.addf %14, %15 : vector<8x128xf32>
    %cst_12 = arith.constant 0.000000e+00 : f32
    %17 = vector.broadcast %cst_12 : f32 to vector<8x128xf32>
    %18 = arith.maximumf %16, %17 : vector<8x128xf32>
    %19 = arith.truncf %18 : vector<8x128xf32> to vector<8x128xbf16>
    %c0_13 = arith.constant 0 : index
    %c0_14 = arith.constant 0 : index
    %20 = vector.load %arg4[%c0_13, %c0_14] : memref<128x64xbf16, #tpu.memory_space<vmem>>, vector<128x64xbf16>
    %cst_15 = arith.constant dense<0.000000e+00> : vector<8x64xf32>
    %21 = tpu.matmul %19, %20, %cst_15 {dimension_numbers = #tpu.dot_dimension_numbers<[1], [0], [0], [1], [0, 0, 1, 1], [], []>} : vector<8x128xbf16>, vector<128x64xbf16>, vector<8x64xf32> -> vector<8x64xf32>
    %22 = vector.broadcast %4 : vector<1x64xf32> to vector<8x64xf32>
    %23 = arith.addf %21, %22 : vector<8x64xf32>
    %cst_16 = arith.constant 0.000000e+00 : f32
    %24 = vector.broadcast %cst_16 : f32 to vector<8x64xf32>
    %25 = arith.maximumf %23, %24 : vector<8x64xf32>
    %26 = arith.truncf %25 : vector<8x64xf32> to vector<8x64xbf16>
    %c0_17 = arith.constant 0 : index
    %c0_18 = arith.constant 0 : index
    %27 = vector.load %arg5[%c0_17, %c0_18] : memref<64x4xbf16, #tpu.memory_space<vmem>>, vector<64x4xbf16>
    %cst_19 = arith.constant dense<0.000000e+00> : vector<8x4xf32>
    %28 = tpu.matmul %26, %27, %cst_19 {dimension_numbers = #tpu.dot_dimension_numbers<[1], [0], [0], [1], [0, 0, 1, 1], [], []>} : vector<8x64xbf16>, vector<64x4xbf16>, vector<8x4xf32> -> vector<8x4xf32>
    %29 = vector.broadcast %5 : vector<1x4xf32> to vector<8x4xf32>
    %30 = arith.addf %28, %29 : vector<8x4xf32>
    %c0_20 = arith.constant 0 : index
    %c0_21 = arith.constant 0 : index
    %31 = vector.load %arg7[%c0_20, %c0_21] : memref<8x4xf32, #tpu.memory_space<vmem>>, vector<8x4xf32>
    tpu.vector_store %arg7[%c0_20, %c0_21], %30 {strides = array<i32>} : memref<8x4xf32, #tpu.memory_space<vmem>>, vector<8x4xf32>,
    return
  }
  func.func @transform_0(%arg0: i32) -> (i32, i32) {
    %c0_i32 = arith.constant 0 : i32
    %c0_i32_0 = arith.constant 0 : i32
    return %arg0, %c0_i32 : i32, i32
  }
  func.func @transform_1(%arg0: i32) -> (i32, i32) {
    %c0_i32 = arith.constant 0 : i32
    %c0_i32_0 = arith.constant 0 : i32
    %c0_i32_1 = arith.constant 0 : i32
    return %c0_i32, %c0_i32_0 : i32, i32
  }
  func.func @transform_2(%arg0: i32) -> (i32, i32) {
    %c0_i32 = arith.constant 0 : i32
    %c0_i32_0 = arith.constant 0 : i32
    %c0_i32_1 = arith.constant 0 : i32
    return %c0_i32, %c0_i32_0 : i32, i32
  }
  func.func @transform_3(%arg0: i32) -> (i32, i32) {
    %c0_i32 = arith.constant 0 : i32
    %c0_i32_0 = arith.constant 0 : i32
    %c0_i32_1 = arith.constant 0 : i32
    return %c0_i32, %c0_i32_0 : i32, i32
  }
  func.func @transform_4(%arg0: i32) -> (i32, i32) {
    %c0_i32 = arith.constant 0 : i32
    %c0_i32_0 = arith.constant 0 : i32
    %c0_i32_1 = arith.constant 0 : i32
    return %c0_i32, %c0_i32_0 : i32, i32
  }
  func.func @transform_5(%arg0: i32) -> (i32, i32) {
    %c0_i32 = arith.constant 0 : i32
    %c0_i32_0 = arith.constant 0 : i32
    %c0_i32_1 = arith.constant 0 : i32
    return %c0_i32, %c0_i32_0 : i32, i32
  }
  func.func @transform_6(%arg0: i32) -> (i32, i32) {
    %c0_i32 = arith.constant 0 : i32
    %c0_i32_0 = arith.constant 0 : i32
    return %arg0, %c0_i32 : i32, i32
  }
}

module attributes {stable_mosaic.version = 11 : i64} {
  func.func @dqn_kernel(%arg0: i32, %arg1: memref<8x14xf32, #tpu.memory_space<vmem>>, %arg2: memref<14x256xbf16, #tpu.memory_space<vmem>>, %arg3: memref<256x128xbf16, #tpu.memory_space<vmem>>, %arg4: memref<128x64xbf16, #tpu.memory_space<vmem>>, %arg5: memref<64x4xbf16, #tpu.memory_space<vmem>>, %arg6: memref<4x256xf32, #tpu.memory_space<vmem>>, %arg7: memref<8x4xf32, #tpu.memory_space<vmem>>) attributes {dimension_semantics = [#tpu.dimension_semantics<parallel>], iteration_bounds = array<i64: 1>, scalar_prefetch = 0 : i64, scratch_operands = 0 : i64, tpu.core_type = #tpu.core_type<tc>, window_params = [{transform_indices = @transform_0, window_bounds = array<i64: 8, 14>}, {pipeline_mode = #tpu.pipeline_mode<synchronous>, transform_indices = @transform_1, window_bounds = array<i64: 14, 256>}, {pipeline_mode = #tpu.pipeline_mode<synchronous>, transform_indices = @transform_2, window_bounds = array<i64: 256, 128>}, {pipeline_mode = #tpu.pipeline_mode<synchronous>, transform_indices = @transform_3, window_bounds = array<i64: 128, 64>}, {pipeline_mode = #tpu.pipeline_mode<synchronous>, transform_indices = @transform_4, window_bounds = array<i64: 64, 4>}, {pipeline_mode = #tpu.pipeline_mode<synchronous>, transform_indices = @transform_5, window_bounds = array<i64: 4, 256>}, {transform_indices = @transform_6, window_bounds = array<i64: 8, 4>}]} {
    %c0 = arith.constant 0 : index
    %c0_0 = arith.constant 0 : index
    %0 = vector.load %arg1[%c0, %c0_0] : memref<8x14xf32, #tpu.memory_space<vmem>>, vector<8x14xf32>
    %1 = arith.truncf %0 : vector<8x14xf32> to vector<8x14xbf16>
    %c0_1 = arith.constant 0 : index
    %c0_2 = arith.constant 0 : index
    %2 = vector.load %arg6[%c0_1, %c0_2] : memref<4x256xf32, #tpu.memory_space<vmem>>, vector<1x256xf32>
    %c1 = arith.constant 1 : index
    %c0_3 = arith.constant 0 : index
    %3 = vector.load %arg6[%c1, %c0_3] : memref<4x256xf32, #tpu.memory_space<vmem>>, vector<1x128xf32>
    %c2 = arith.constant 2 : index
    %c0_4 = arith.constant 0 : index
    %4 = vector.load %arg6[%c2, %c0_4] : memref<4x256xf32, #tpu.memory_space<vmem>>, vector<1x64xf32>
    %c3 = arith.constant 3 : index
    %c0_5 = arith.constant 0 : index
    %5 = vector.load %arg6[%c3, %c0_5] : memref<4x256xf32, #tpu.memory_space<vmem>>, vector<1x4xf32>
    %c0_6 = arith.constant 0 : index
    %c0_7 = arith.constant 0 : index
    %6 = vector.load %arg2[%c0_6, %c0_7] : memref<14x256xbf16, #tpu.memory_space<vmem>>, vector<14x256xbf16>
    %cst = arith.constant dense<0.000000e+00> : vector<8x256xf32>
    %7 = tpu.matmul %1, %6, %cst {dimension_numbers = #tpu.dot_dimension_numbers<[1], [0], [0], [1], [0, 0, 1, 1], [], []>} : vector<8x14xbf16>, vector<14x256xbf16>, vector<8x256xf32> -> vector<8x256xf32>
    %8 = vector.broadcast %2 : vector<1x256xf32> to vector<8x256xf32>
    %9 = arith.addf %7, %8 : vector<8x256xf32>
    %cst_8 = arith.constant 0.000000e+00 : f32
    %10 = vector.broadcast %cst_8 : f32 to vector<8x256xf32>
    %11 = arith.maximumf %9, %10 : vector<8x256xf32>
    %12 = arith.truncf %11 : vector<8x256xf32> to vector<8x256xbf16>
    %c0_9 = arith.constant 0 : index
    %c0_10 = arith.constant 0 : index
    %13 = vector.load %arg3[%c0_9, %c0_10] : memref<256x128xbf16, #tpu.memory_space<vmem>>, vector<256x128xbf16>
    %cst_11 = arith.constant dense<0.000000e+00> : vector<8x128xf32>
    %14 = tpu.matmul %12, %13, %cst_11 {dimension_numbers = #tpu.dot_dimension_numbers<[1], [0], [0], [1], [0, 0, 1, 1], [], []>} : vector<8x256xbf16>, vector<256x128xbf16>, vector<8x128xf32> -> vector<8x128xf32>
    %15 = vector.broadcast %3 : vector<1x128xf32> to vector<8x128xf32>
    %16 = arith.addf %14, %15 : vector<8x128xf32>
    %cst_12 = arith.constant 0.000000e+00 : f32
    %17 = vector.broadcast %cst_12 : f32 to vector<8x128xf32>
    %18 = arith.maximumf %16, %17 : vector<8x128xf32>
    %19 = arith.truncf %18 : vector<8x128xf32> to vector<8x128xbf16>
    %c0_13 = arith.constant 0 : index
    %c0_14 = arith.constant 0 : index
    %20 = vector.load %arg4[%c0_13, %c0_14] : memref<128x64xbf16, #tpu.memory_space<vmem>>, vector<128x64xbf16>
    %cst_15 = arith.constant dense<0.000000e+00> : vector<8x64xf32>
    %21 = tpu.matmul %19, %20, %cst_15 {dimension_numbers = #tpu.dot_dimension_numbers<[1], [0], [0], [1], [0, 0, 1, 1], [], []>} : vector<8x128xbf16>, vector<128x64xbf16>, vector<8x64xf32> -> vector<8x64xf32>
    %22 = vector.broadcast %4 : vector<1x64xf32> to vector<8x64xf32>
    %23 = arith.addf %21, %22 : vector<8x64xf32>
    %cst_16 = arith.constant 0.000000e+00 : f32
    %24 = vector.broadcast %cst_16 : f32 to vector<8x64xf32>
    %25 = arith.maximumf %23, %24 : vector<8x64xf32>
    %26 = arith.truncf %25 : vector<8x64xf32> to vector<8x64xbf16>
    %c0_17 = arith.constant 0 : index
    %c0_18 = arith.constant 0 : index
    %27 = vector.load %arg5[%c0_17, %c0_18] : memref<64x4xbf16, #tpu.memory_space<vmem>>, vector<64x4xbf16>
    %cst_19 = arith.constant dense<0.000000e+00> : vector<8x4xf32>
    %28 = tpu.matmul %26, %27, %cst_19 {dimension_numbers = #tpu.dot_dimension_numbers<[1], [0], [0], [1], [0, 0, 1, 1], [], []>} : vector<8x64xbf16>, vector<64x4xbf16>, vector<8x4xf32> -> vector<8x4xf32>
    %29 = vector.broadcast %5 : vector<1x4xf32> to vector<8x4xf32>
    %30 = arith.addf %28, %29 : vector<8x4xf32>
    %c0_20 = arith.constant 0 : index
    %c0_21 = arith.constant 0 : index
    %31 = vector.load %arg7[%c0_20, %c0_21] : memref<8x4xf32, #tpu.memory_space<vmem>>, vector<8x4xf32>
    tpu.vector_store %arg7[%c0_20, %c0_21], %30 {strides = array<i32>} : memref<8x4xf32, #tpu.memory_space<vmem>>, vector<8x4xf32>,
    return
  }
  func.func @transform_0(%arg0: i32) -> (i32, i32) {
    %c0_i32 = arith.constant 0 : i32
    %c0_i32_0 = arith.constant 0 : i32
    return %arg0, %c0_i32 : i32, i32
  }
  func.func @transform_1(%arg0: i32) -> (i32, i32) {
    %c0_i32 = arith.constant 0 : i32
    %c0_i32_0 = arith.constant 0 : i32
    %c0_i32_1 = arith.constant 0 : i32
    return %c0_i32, %c0_i32_0 : i32, i32
  }
  func.func @transform_2(%arg0: i32) -> (i32, i32) {
    %c0_i32 = arith.constant 0 : i32
    %c0_i32_0 = arith.constant 0 : i32
    %c0_i32_1 = arith.constant 0 : i32
    return %c0_i32, %c0_i32_0 : i32, i32
  }
  func.func @transform_3(%arg0: i32) -> (i32, i32) {
    %c0_i32 = arith.constant 0 : i32
    %c0_i32_0 = arith.constant 0 : i32
    %c0_i32_1 = arith.constant 0 : i32
    return %c0_i32, %c0_i32_0 : i32, i32
  }
  func.func @transform_4(%arg0: i32) -> (i32, i32) {
    %c0_i32 = arith.constant 0 : i32
    %c0_i32_0 = arith.constant 0 : i32
    %c0_i32_1 = arith.constant 0 : i32
    return %c0_i32, %c0_i32_0 : i32, i32
  }
  func.func @transform_5(%arg0: i32) -> (i32, i32) {
    %c0_i32 = arith.constant 0 : i32
    %c0_i32_0 = arith.constant 0 : i32
    %c0_i32_1 = arith.constant 0 : i32
    return %c0_i32, %c0_i32_0 : i32, i32
  }
  func.func @transform_6(%arg0: i32) -> (i32, i32) {
    %c0_i32 = arith.constant 0 : i32
    %c0_i32_0 = arith.constant 0 : i32
    return %arg0, %c0_i32 : i32, i32
  }
}

</mosaic_0001>

<llo_original>
// kernel: tpu_custom_call.1
$region0: #{tpu_custom_call.1}
  #allocation0 [shape = 'u32[]', space=smem, size = 0x4, offset = 0x4, fixed_abs, tag = 'smem constant byte address 0x4 - core index']
  #allocation1 [shape = 'u32[144,128]{1,0:T(1,128)}', space=vmem, size = 0x12000, scoped, tag = 'internal scratch']
  %s0 = inlined_call_operand.hbm [shape: f32[8,14], index: 0, kind: input, shape index: {}]
  %s1 = inlined_call_operand.hbm [shape: bf16[14,256], index: 1, kind: input, shape index: {}]
  %s2 = inlined_call_operand.vmem [shape: bf16[256,128], index: 2, kind: input, shape index: {}]
  %s3 = inlined_call_operand.vmem [shape: bf16[128,64], index: 3, kind: input, shape index: {}]
  %s4 = inlined_call_operand.vmem [shape: bf16[64,4], index: 4, kind: input, shape index: {}]
  %s5 = inlined_call_operand.vmem [shape: f32[4,256], index: 5, kind: input, shape index: {}]
  %s6 = inlined_call_operand.vmem [shape: f32[8,4], index: 6, kind: output, shape index: {}]
  %s7 = sld [smem:[#allocation0]]
  $region42: #{tpu_custom_call.1} parent=0
    _
  %s9 = ssub.s32 1, %s7
  %s10 = scalar_select 0, %s9, %s7
  $region1: #{tpu_custom_call.1} parent=0
    #allocation2 [shape = 'u8[4096]{0}', space=vmem, size = 0x1000, scoped, tag = 'input window, operand 0, single buffered']
    #allocation3 [shape = 's32[1]{0}', space=sflag, size = 0x4, scoped, tag = 'scoped memory for tpu_custom_call.1']
    #allocation4 [shape = 'u8[8192]{0}', space=vmem, size = 0x2000, scoped, tag = 'input window, operand 1, single buffered']
    #allocation5 [shape = 's32[1]{0}', space=sflag, size = 0x4, scoped, tag = 'scoped memory for tpu_custom_call.1']
    %11 = vsyncpa [#allocation3], 0
    %12 = vsyncpa [#allocation5], 0
    // Predicated region
    $region2: #{tpu_custom_call.1} parent=1 // pred_check
      _
    $region3: #{tpu_custom_call.1} parent=1 // pred_check_branch
      %14 = sbr.rel (0) target = $region5
    $region4: #{tpu_custom_call.1} parent=1 // pred_region
      %s16 = ssub.s32 128, 128
      %17 = vsyncadd [#allocation3], %s16
      %s19 = sshll.u32 [#allocation2], 4
      %s20 = int_to_ptr.vmem [resolvable:$true] %s19
      %22 = dma.hbm_to_vmem [thread:$0]  %s0, 128, %s20, [#allocation3]
    $region5: #{tpu_custom_call.1} parent=1 // pred_fallthru
      _
    // Predicated region
    $region6: #{tpu_custom_call.1} parent=1 // pred_check
      _
    $region7: #{tpu_custom_call.1} parent=1 // pred_check_branch
      %24 = sbr.rel (0) target = $region9
    $region8: #{tpu_custom_call.1} parent=1 // pred_region
      %s26 = ssub.s32 256, 256
      %27 = vsyncadd [#allocation5], %s26
      %s28 = sshll.u32 [#allocation4], 4
      %s29 = int_to_ptr.vmem [resolvable:$true] %s28
      %34 = dma.hbm_to_vmem [thread:$0]  %s1, 256, %s29, [#allocation5], 128, 128, 8
    $region9: #{tpu_custom_call.1} parent=1 // pred_fallthru
      _
    // Predicated region
    $region10: #{tpu_custom_call.1} parent=1 // pred_check
      _
    $region11: #{tpu_custom_call.1} parent=1 // pred_check_branch
      %36 = sbr.rel (0) target = $region13
    $region12: #{tpu_custom_call.1} parent=1 // pred_region
      _
    $region13: #{tpu_custom_call.1} parent=1 // pred_fallthru
      _
    // Predicated region
    $region14: #{tpu_custom_call.1} parent=1 // pred_check
      _
    $region15: #{tpu_custom_call.1} parent=1 // pred_check_branch
      %38 = sbr.rel (0) target = $region17
    $region16: #{tpu_custom_call.1} parent=1 // pred_region
      _
    $region17: #{tpu_custom_call.1} parent=1 // pred_fallthru
      _
    // Predicated region
    $region18: #{tpu_custom_call.1} parent=1 // pred_check
      _
    $region19: #{tpu_custom_call.1} parent=1 // pred_check_branch
      %40 = sbr.rel (0) target = $region21
    $region20: #{tpu_custom_call.1} parent=1 // pred_region
      _
    $region21: #{tpu_custom_call.1} parent=1 // pred_fallthru
      _
    // Predicated region
    $region22: #{tpu_custom_call.1} parent=1 // pred_check
      _
    $region23: #{tpu_custom_call.1} parent=1 // pred_check_branch
      %42 = sbr.rel (0) target = $region25
    $region24: #{tpu_custom_call.1} parent=1 // pred_region
      _
    $region25: #{tpu_custom_call.1} parent=1 // pred_fallthru
      _
    // Predicated region
    $region26: #{tpu_custom_call.1} parent=1 // pred_check
      _
    $region27: #{tpu_custom_call.1} parent=1 // pred_check_branch
      %44 = sbr.rel (0) target = $region29
    $region28: #{tpu_custom_call.1} parent=1 // pred_region
      %45 = dma.done [#allocation3], 128
    $region29: #{tpu_custom_call.1} parent=1 // pred_fallthru
      _
    // Predicated region
    $region30: #{tpu_custom_call.1} parent=1 // pred_check
      _
    $region31: #{tpu_custom_call.1} parent=1 // pred_check_branch
      %47 = sbr.rel (0) target = $region33
    $region32: #{tpu_custom_call.1} parent=1 // pred_region
      %48 = dma.done [#allocation5], 256
    $region33: #{tpu_custom_call.1} parent=1 // pred_fallthru
      _
    %v50 = vld [vmem:[#allocation2] sm:$0xff]
    %v51 = vpack.c.bf16 %v50, %v50
    %v52 = vld [vmem:[%s5] ss:$4 sm:$0x3]
    %v53 = vld [vmem:[%s5 + $0x1] sm:$0x1]
    %v54 = vld [vmem:[%s5 + $0x2] sm:$0x1]
    %v55 = vld [vmem:[%s5 + $0x3] sm:$0x1]
    %v56 = vld [vmem:[#allocation4] sm:$0xff]
    %v57 = vld [vmem:[#allocation4 + $0x8] sm:$0x77]
    %v59 = vlaneseq
    %v60 = vshrl.u32 %v59, 7
    %v61 = vsub.s32 0, %v60
    %v62 = vrot.slane %v52, %v61
    %v63 = vlaneseq
    %v64 = vshrl.u32 %v63, 7
    %v65 = vsub.s32 1, %v64
    %v66 = vrot.slane %v52, %v65
    %v71 = vunpack.c.l.b16 %v56
    %v72 = vunpack.c.h.b16 %v56
    %v73 = vunpack.c.l.b16 %v57
    %v74 = vunpack.c.h.b16 %v57
    %v75 = vpack.c.b16 %v73, %v71
    %v76 = vpack.c.b16 %v74, %v72
    %vm77 = vcmask 113664
    %v79 = vsel %vm77, %v51, 0
    %vm81 = vcmask 1046528
    %v83 = vsel %vm81, %v75, 0
    %v86 = vsel %vm81, %v76, 0
    %88 = vmatprep.subr.bf16.mxu0 0
    %89 = vmatpush1.bf16.msra.mxu0 0
    %90 = vmatprep.subr.bf16.mxu0 0
    %91 = vmatpush1.bf16.msra.mxu0 0
    %92 = vmatprep.subr.bf16.mxu0 0
    %93 = vmatpush1.bf16.msra.mxu0 0
    %94 = vmatprep.subr.bf16.mxu0 0
    %95 = vmatpush1.bf16.msra.mxu0 0
    %96 = vmatprep.subr.bf16.mxu0 0
    %97 = vmatpush1.bf16.msra.mxu0 0
    %98 = vmatprep.subr.bf16.mxu0 0
    %99 = vmatpush1.bf16.msra.mxu0 0
    %100 = vmatprep.subr.bf16.mxu0 0
    %101 = vmatpush1.bf16.msra.mxu0 0
    %102 = vmatprep.subr.bf16.mxu0 %v86
    %103 = vmatpush1.bf16.msra.mxu0 %v83
    %104 = vmatprep.subr.bf16.mxu0 0
    %105 = vmatpush2.bf16.msra.mxu0 0
    %106 = vmatprep.subr.bf16.mxu0 0
    %107 = vmatpush2.bf16.msra.mxu0 0
    %108 = vmatprep.subr.bf16.mxu0 0
    %109 = vmatpush2.bf16.msra.mxu0 0
    %110 = vmatprep.subr.bf16.mxu0 0
    %111 = vmatpush2.bf16.msra.mxu0 0
    %112 = vmatprep.subr.bf16.mxu0 0
    %113 = vmatpush2.bf16.msra.mxu0 0
    %114 = vmatprep.subr.bf16.mxu0 0
    %115 = vmatpush2.bf16.msra.mxu0 0
    %116 = vmatprep.subr.bf16.mxu0 0
    %117 = vmatpush2.bf16.msra.mxu0 0
    %118 = vmatprep.subr.bf16.mxu0 0
    %119 = vmatpush2.bf16.msra.mxu0 0
    %120 = vmatprep.mubr.bf16.mxu0 0
    %121 = vmatmul.mubr.bf16.gmra.mxu0 %v79
    %v122 = vpop.f32.mrf.mxu0
    %v123 = vadd.f32 %v62, %v122
    %v124 = vpop.f32.mrf.mxu0
    %v125 = vadd.f32 %v66, %v124
    %v126 = vpop.f32.mrf.mxu0
    %v127 = vpop.f32.mrf.mxu0
    %128 = vdwg.mxu0
    %v129 = vmax.f32 %v123, 0.0
    %v130 = vmax.f32 %v125, 0.0
    %v131 = vpack.c.bf16 %v129, %v129
    %v132 = vpack.c.bf16 %v130, %v130
    %v133 = vld [vmem:[%s2] sm:$0xf]
    %v134 = vld [vmem:[%s2 + $0x4] sm:$0xf]
    %v135 = vld [vmem:[%s2 + $0x8] sm:$0xf]
    %v136 = vld [vmem:[%s2 + $0xc] sm:$0xf]
    %v137 = vld [vmem:[%s2 + $0x10] sm:$0xf]
    %v138 = vld [vmem:[%s2 + $0x14] sm:$0xf]
    %v139 = vld [vmem:[%s2 + $0x18] sm:$0xf]
    %v140 = vld [vmem:[%s2 + $0x1c] sm:$0xf]
    %v141 = vld [vmem:[%s2 + $0x20] sm:$0xf]
    %v142 = vld [vmem:[%s2 + $0x24] sm:$0xf]
    %v143 = vld [vmem:[%s2 + $0x28] sm:$0xf]
    %v144 = vld [vmem:[%s2 + $0x2c] sm:$0xf]
    %v145 = vld [vmem:[%s2 + $0x30] sm:$0xf]
    %v146 = vld [vmem:[%s2 + $0x34] sm:$0xf]
    %v147 = vld [vmem:[%s2 + $0x38] sm:$0xf]
    %v148 = vld [vmem:[%s2 + $0x3c] sm:$0xf]
    %v149 = vld [vmem:[%s2 + $0x40] sm:$0xf]
    %v150 = vld [vmem:[%s2 + $0x44] sm:$0xf]
    %v151 = vld [vmem:[%s2 + $0x48] sm:$0xf]
    %v152 = vld [vmem:[%s2 + $0x4c] sm:$0xf]
    %v153 = vld [vmem:[%s2 + $0x50] sm:$0xf]
    %v154 = vld [vmem:[%s2 + $0x54] sm:$0xf]
    %v155 = vld [vmem:[%s2 + $0x58] sm:$0xf]
    %v156 = vld [vmem:[%s2 + $0x5c] sm:$0xf]
    %v157 = vld [vmem:[%s2 + $0x60] sm:$0xf]
    %v158 = vld [vmem:[%s2 + $0x64] sm:$0xf]
    %v159 = vld [vmem:[%s2 + $0x68] sm:$0xf]
    %v160 = vld [vmem:[%s2 + $0x6c] sm:$0xf]
    %v161 = vld [vmem:[%s2 + $0x70] sm:$0xf]
    %v162 = vld [vmem:[%s2 + $0x74] sm:$0xf]
    %v163 = vld [vmem:[%s2 + $0x78] sm:$0xf]
    %v164 = vld [vmem:[%s2 + $0x7c] sm:$0xf]
    %v165 = vlaneseq
    %v166 = vshrl.u32 %v165, 7
    %v167 = vsub.s32 0, %v166
    %v168 = vrot.slane %v53, %v167
    %v201 = vunpack.c.l.b16 %v133
    %v202 = vunpack.c.l.b16 %v134
    %v203 = vunpack.c.l.b16 %v135
    %v204 = vunpack.c.l.b16 %v136
    %v205 = vunpack.c.l.b16 %v137
    %v206 = vunpack.c.l.b16 %v138
    %v207 = vunpack.c.l.b16 %v139
    %v208 = vunpack.c.l.b16 %v140
    %v209 = vunpack.c.l.b16 %v141
    %v210 = vunpack.c.l.b16 %v142
    %v211 = vunpack.c.l.b16 %v143
    %v212 = vunpack.c.l.b16 %v144
    %v213 = vunpack.c.l.b16 %v145
    %v214 = vunpack.c.l.b16 %v146
    %v215 = vunpack.c.l.b16 %v147
    %v216 = vunpack.c.l.b16 %v148
    %v217 = vunpack.c.l.b16 %v149
    %v218 = vunpack.c.l.b16 %v150
    %v219 = vunpack.c.l.b16 %v151
    %v220 = vunpack.c.l.b16 %v152
    %v221 = vunpack.c.l.b16 %v153
    %v222 = vunpack.c.l.b16 %v154
    %v223 = vunpack.c.l.b16 %v155
    %v224 = vunpack.c.l.b16 %v156
    %v225 = vunpack.c.l.b16 %v157
    %v226 = vunpack.c.l.b16 %v158
    %v227 = vunpack.c.l.b16 %v159
    %v228 = vunpack.c.l.b16 %v160
    %v229 = vunpack.c.l.b16 %v161
    %v230 = vunpack.c.l.b16 %v162
    %v231 = vunpack.c.l.b16 %v163
    %v232 = vunpack.c.l.b16 %v164
    %v233 = vpack.c.b16 %v202, %v201
    %v234 = vpack.c.b16 %v204, %v203
    %v235 = vpack.c.b16 %v206, %v205
    %v236 = vpack.c.b16 %v208, %v207
    %v237 = vpack.c.b16 %v210, %v209
    %v238 = vpack.c.b16 %v212, %v211
    %v239 = vpack.c.b16 %v214, %v213
    %v240 = vpack.c.b16 %v216, %v215
    %v241 = vpack.c.b16 %v218, %v217
    %v242 = vpack.c.b16 %v220, %v219
    %v243 = vpack.c.b16 %v222, %v221
    %v244 = vpack.c.b16 %v224, %v223
    %v245 = vpack.c.b16 %v226, %v225
    %v246 = vpack.c.b16 %v228, %v227
    %v247 = vpack.c.b16 %v230, %v229
    %v248 = vpack.c.b16 %v232, %v231
    %265 = vmatprep.subr.bf16.mxu0 0
    %266 = vmatpush1.bf16.msra.mxu0 %v240
    %267 = vmatprep.subr.bf16.mxu0 0
    %268 = vmatpush1.bf16.msra.mxu0 %v239
    %269 = vmatprep.subr.bf16.mxu0 0
    %270 = vmatpush1.bf16.msra.mxu0 %v238
    %271 = vmatprep.subr.bf16.mxu0 0
    %272 = vmatpush1.bf16.msra.mxu0 %v237
    %273 = vmatprep.subr.bf16.mxu0 0
    %274 = vmatpush1.bf16.msra.mxu0 %v236
    %275 = vmatprep.subr.bf16.mxu0 0
    %276 = vmatpush1.bf16.msra.mxu0 %v235
    %277 = vmatprep.subr.bf16.mxu0 0
    %278 = vmatpush1.bf16.msra.mxu0 %v234
    %279 = vmatprep.subr.bf16.mxu0 0
    %280 = vmatpush1.bf16.msra.mxu0 %v233
    %281 = vmatprep.subr.bf16.mxu0 0
    %282 = vmatpush2.bf16.msra.mxu0 %v248
    %283 = vmatprep.subr.bf16.mxu0 0
    %284 = vmatpush2.bf16.msra.mxu0 %v247
    %285 = vmatprep.subr.bf16.mxu0 0
    %286 = vmatpush2.bf16.msra.mxu0 %v246
    %287 = vmatprep.subr.bf16.mxu0 0
    %288 = vmatpush2.bf16.msra.mxu0 %v245
    %289 = vmatprep.subr.bf16.mxu0 0
    %290 = vmatpush2.bf16.msra.mxu0 %v244
    %291 = vmatprep.subr.bf16.mxu0 0
    %292 = vmatpush2.bf16.msra.mxu0 %v243
    %293 = vmatprep.subr.bf16.mxu0 0
    %294 = vmatpush2.bf16.msra.mxu0 %v242
    %295 = vmatprep.subr.bf16.mxu0 0
    %296 = vmatpush2.bf16.msra.mxu0 %v241
    %297 = vmatprep.mubr.bf16.mxu0 %v132
    %298 = vmatmul.mubr.bf16.gmra.mxu0 %v131
    %v299 = vpop.f32.mrf.mxu0
    %v300 = vadd.f32 %v168, %v299
    %v301 = vpop.f32.mrf.mxu0
    %v302 = vpop.f32.mrf.mxu0
    %v303 = vpop.f32.mrf.mxu0
    %304 = vdwg.mxu0
    %v305 = vmax.f32 %v300, 0.0
    %v306 = vpack.c.bf16 %v305, %v305
    %v307 = vld [vmem:[%s3] sm:$0xf]
    %v308 = vld [vmem:[%s3 + $0x4] sm:$0xf]
    %v309 = vld [vmem:[%s3 + $0x8] sm:$0xf]
    %v310 = vld [vmem:[%s3 + $0xc] sm:$0xf]
    %v311 = vld [vmem:[%s3 + $0x10] sm:$0xf]
    %v312 = vld [vmem:[%s3 + $0x14] sm:$0xf]
    %v313 = vld [vmem:[%s3 + $0x18] sm:$0xf]
    %v314 = vld [vmem:[%s3 + $0x1c] sm:$0xf]
    %v315 = vld [vmem:[%s3 + $0x20] sm:$0xf]
    %v316 = vld [vmem:[%s3 + $0x24] sm:$0xf]
    %v317 = vld [vmem:[%s3 + $0x28] sm:$0xf]
    %v318 = vld [vmem:[%s3 + $0x2c] sm:$0xf]
    %v319 = vld [vmem:[%s3 + $0x30] sm:$0xf]
    %v320 = vld [vmem:[%s3 + $0x34] sm:$0xf]
    %v321 = vld [vmem:[%s3 + $0x38] sm:$0xf]
    %v322 = vld [vmem:[%s3 + $0x3c] sm:$0xf]
    %v323 = vlaneseq
    %v324 = vshrl.u32 %v323, 7
    %v325 = vsub.s32 0, %v324
    %v326 = vrot.slane %v54, %v325
    %v343 = vunpack.c.l.b16 %v307
    %v344 = vunpack.c.l.b16 %v308
    %v345 = vunpack.c.l.b16 %v309
    %v346 = vunpack.c.l.b16 %v310
    %v347 = vunpack.c.l.b16 %v311
    %v348 = vunpack.c.l.b16 %v312
    %v349 = vunpack.c.l.b16 %v313
    %v350 = vunpack.c.l.b16 %v314
    %v351 = vunpack.c.l.b16 %v315
    %v352 = vunpack.c.l.b16 %v316
    %v353 = vunpack.c.l.b16 %v317
    %v354 = vunpack.c.l.b16 %v318
    %v355 = vunpack.c.l.b16 %v319
    %v356 = vunpack.c.l.b16 %v320
    %v357 = vunpack.c.l.b16 %v321
    %v358 = vunpack.c.l.b16 %v322
    %v359 = vpack.c.b16 %v344, %v343
    %v360 = vpack.c.b16 %v346, %v345
    %v361 = vpack.c.b16 %v348, %v347
    %v362 = vpack.c.b16 %v350, %v349
    %v363 = vpack.c.b16 %v352, %v351
    %v364 = vpack.c.b16 %v354, %v353
    %v365 = vpack.c.b16 %v356, %v355
    %v366 = vpack.c.b16 %v358, %v357
    %375 = vmatprep.subr.bf16.mxu0 0
    %376 = vmatpush1.bf16.msra.mxu0 %v366
    %377 = vmatprep.subr.bf16.mxu0 0
    %378 = vmatpush1.bf16.msra.mxu0 %v365
    %379 = vmatprep.subr.bf16.mxu0 0
    %380 = vmatpush1.bf16.msra.mxu0 %v364
    %381 = vmatprep.subr.bf16.mxu0 0
    %382 = vmatpush1.bf16.msra.mxu0 %v363
    %383 = vmatprep.subr.bf16.mxu0 0
    %384 = vmatpush1.bf16.msra.mxu0 %v362
    %385 = vmatprep.subr.bf16.mxu0 0
    %386 = vmatpush1.bf16.msra.mxu0 %v361
    %387 = vmatprep.subr.bf16.mxu0 0
    %388 = vmatpush1.bf16.msra.mxu0 %v360
    %389 = vmatprep.subr.bf16.mxu0 0
    %390 = vmatpush1.bf16.msra.mxu0 %v359
    %391 = vmatprep.subr.bf16.mxu0 0
    %392 = vmatpush2.bf16.msra.mxu0 0
    %393 = vmatprep.subr.bf16.mxu0 0
    %394 = vmatpush2.bf16.msra.mxu0 0
    %395 = vmatprep.subr.bf16.mxu0 0
    %396 = vmatpush2.bf16.msra.mxu0 0
    %397 = vmatprep.subr.bf16.mxu0 0
    %398 = vmatpush2.bf16.msra.mxu0 0
    %399 = vmatprep.subr.bf16.mxu0 0
    %400 = vmatpush2.bf16.msra.mxu0 0
    %401 = vmatprep.subr.bf16.mxu0 0
    %402 = vmatpush2.bf16.msra.mxu0 0
    %403 = vmatprep.subr.bf16.mxu0 0
    %404 = vmatpush2.bf16.msra.mxu0 0
    %405 = vmatprep.subr.bf16.mxu0 0
    %406 = vmatpush2.bf16.msra.mxu0 0
    %407 = vmatprep.mubr.bf16.mxu0 0
    %408 = vmatmul.mubr.bf16.gmra.mxu0 %v306
    %v409 = vpop.f32.mrf.mxu0
    %v410 = vadd.f32 %v326, %v409
    %v411 = vpop.f32.mrf.mxu0
    %v412 = vpop.f32.mrf.mxu0
    %v413 = vpop.f32.mrf.mxu0
    %414 = vdwg.mxu0
    %v415 = vmax.f32 %v410, 0.0
    %v416 = vpack.c.bf16 %v415, %v415
    %v417 = vld [vmem:[%s4] sm:$0xf]
    %v418 = vld [vmem:[%s4 + $0x4] sm:$0xf]
    %v419 = vld [vmem:[%s4 + $0x8] sm:$0xf]
    %v420 = vld [vmem:[%s4 + $0xc] sm:$0xf]
    %v421 = vld [vmem:[%s4 + $0x10] sm:$0xf]
    %v422 = vld [vmem:[%s4 + $0x14] sm:$0xf]
    %v423 = vld [vmem:[%s4 + $0x18] sm:$0xf]
    %v424 = vld [vmem:[%s4 + $0x1c] sm:$0xf]
    %v425 = vlaneseq
    %v426 = vshrl.u32 %v425, 7
    %v427 = vsub.s32 0, %v426
    %v428 = vrot.slane %v55, %v427
    %v437 = vunpack.c.l.b16 %v417
    %v438 = vunpack.c.l.b16 %v418
    %v439 = vunpack.c.l.b16 %v419
    %v440 = vunpack.c.l.b16 %v420
    %v441 = vunpack.c.l.b16 %v421
    %v442 = vunpack.c.l.b16 %v422
    %v443 = vunpack.c.l.b16 %v423
    %v444 = vunpack.c.l.b16 %v424
    %v445 = vpack.c.b16 %v438, %v437
    %v446 = vpack.c.b16 %v440, %v439
    %v447 = vpack.c.b16 %v442, %v441
    %v448 = vpack.c.b16 %v444, %v443
    %vm453 = vcmask 523264
    %v455 = vsel %vm453, %v416, 0
    %457 = vmatprep.subr.bf16.mxu0 0
    %458 = vmatpush1.bf16.msra.mxu0 0
    %459 = vmatprep.subr.bf16.mxu0 0
    %460 = vmatpush1.bf16.msra.mxu0 0
    %461 = vmatprep.subr.bf16.mxu0 0
    %462 = vmatpush1.bf16.msra.mxu0 0
    %463 = vmatprep.subr.bf16.mxu0 0
    %464 = vmatpush1.bf16.msra.mxu0 0
    %465 = vmatprep.subr.bf16.mxu0 0
    %466 = vmatpush1.bf16.msra.mxu0 %v448
    %467 = vmatprep.subr.bf16.mxu0 0
    %468 = vmatpush1.bf16.msra.mxu0 %v447
    %469 = vmatprep.subr.bf16.mxu0 0
    %470 = vmatpush1.bf16.msra.mxu0 %v446
    %471 = vmatprep.subr.bf16.mxu0 0
    %472 = vmatpush1.bf16.msra.mxu0 %v445
    %473 = vmatprep.subr.bf16.mxu0 0
    %474 = vmatpush2.bf16.msra.mxu0 0
    %475 = vmatprep.subr.bf16.mxu0 0
    %476 = vmatpush2.bf16.msra.mxu0 0
    %477 = vmatprep.subr.bf16.mxu0 0
    %478 = vmatpush2.bf16.msra.mxu0 0
    %479 = vmatprep.subr.bf16.mxu0 0
    %480 = vmatpush2.bf16.msra.mxu0 0
    %481 = vmatprep.subr.bf16.mxu0 0
    %482 = vmatpush2.bf16.msra.mxu0 0
    %483 = vmatprep.subr.bf16.mxu0 0
    %484 = vmatpush2.bf16.msra.mxu0 0
    %485 = vmatprep.subr.bf16.mxu0 0
    %486 = vmatpush2.bf16.msra.mxu0 0
    %487 = vmatprep.subr.bf16.mxu0 0
    %488 = vmatpush2.bf16.msra.mxu0 0
    %489 = vmatprep.mubr.bf16.mxu0 0
    %490 = vmatmul.mubr.bf16.gmra.mxu0 %v455
    %v491 = vpop.f32.mrf.mxu0
    %v492 = vadd.f32 %v428, %v491
    %v493 = vpop.f32.mrf.mxu0
    %v494 = vpop.f32.mrf.mxu0
    %v495 = vpop.f32.mrf.mxu0
    %496 = vdwg.mxu0
    %vm497 = vcmask 31744
    %498 = vst.msk [vmem:[%s6] sm:$0xff] %vm497, %v492
    // Predicated region
    $region34: #{tpu_custom_call.1} parent=1 // pred_check
      _
    $region35: #{tpu_custom_call.1} parent=1 // pred_check_branch
      %500 = sbr.rel (0) target = $region37
    $region36: #{tpu_custom_call.1} parent=1 // pred_region
      _
    $region37: #{tpu_custom_call.1} parent=1 // pred_fallthru
      _
    // Predicated region
    $region38: #{tpu_custom_call.1} parent=1 // pred_check
      _
    $region39: #{tpu_custom_call.1} parent=1 // pred_check_branch
      %502 = sbr.rel (0) target = $region41
    $region40: #{tpu_custom_call.1} parent=1 // pred_region
      _
    $region41: #{tpu_custom_call.1} parent=1 // pred_fallthru
      _
    %503 = vsyncpa [#allocation3], 1
    %504 = vsyncpa [#allocation5], 1

// kernel: tpu_custom_call.1
$region0: #{tpu_custom_call.1}
  #allocation0 [shape = 'u32[]', space=smem, size = 0x4, offset = 0x4, fixed_abs, tag = 'smem constant byte address 0x4 - core index']
  #allocation1 [shape = 'u32[144,128]{1,0:T(1,128)}', space=vmem, size = 0x12000, scoped, tag = 'internal scratch']
  %s0 = inlined_call_operand.hbm [shape: f32[8,14], index: 0, kind: input, shape index: {}]
  %s1 = inlined_call_operand.hbm [shape: bf16[14,256], index: 1, kind: input, shape index: {}]
  %s2 = inlined_call_operand.vmem [shape: bf16[256,128], index: 2, kind: input, shape index: {}]
  %s3 = inlined_call_operand.vmem [shape: bf16[128,64], index: 3, kind: input, shape index: {}]
  %s4 = inlined_call_operand.vmem [shape: bf16[64,4], index: 4, kind: input, shape index: {}]
  %s5 = inlined_call_operand.vmem [shape: f32[4,256], index: 5, kind: input, shape index: {}]
  %s6 = inlined_call_operand.vmem [shape: f32[8,4], index: 6, kind: output, shape index: {}]
  %s7 = sld [smem:[#allocation0]]
  $region42: #{tpu_custom_call.1} parent=0
    _
  %s9 = ssub.s32 1, %s7
  %s10 = scalar_select 0, %s9, %s7
  $region1: #{tpu_custom_call.1} parent=0
    #allocation2 [shape = 'u8[4096]{0}', space=vmem, size = 0x1000, scoped, tag = 'input window, operand 0, single buffered']
    #allocation3 [shape = 's32[1]{0}', space=sflag, size = 0x4, scoped, tag = 'scoped memory for tpu_custom_call.1']
    #allocation4 [shape = 'u8[8192]{0}', space=vmem, size = 0x2000, scoped, tag = 'input window, operand 1, single buffered']
    #allocation5 [shape = 's32[1]{0}', space=sflag, size = 0x4, scoped, tag = 'scoped memory for tpu_custom_call.1']
    %11 = vsyncpa [#allocation3], 0
    %12 = vsyncpa [#allocation5], 0
    // Predicated region
    $region2: #{tpu_custom_call.1} parent=1 // pred_check
      _
    $region3: #{tpu_custom_call.1} parent=1 // pred_check_branch
      %14 = sbr.rel (0) target = $region5
    $region4: #{tpu_custom_call.1} parent=1 // pred_region
      %s16 = ssub.s32 128, 128
      %17 = vsyncadd [#allocation3], %s16
      %s19 = sshll.u32 [#allocation2], 4
      %s20 = int_to_ptr.vmem [resolvable:$true] %s19
      %22 = dma.hbm_to_vmem [thread:$0]  %s0, 128, %s20, [#allocation3]
    $region5: #{tpu_custom_call.1} parent=1 // pred_fallthru
      _
    // Predicated region
    $region6: #{tpu_custom_call.1} parent=1 // pred_check
      _
    $region7: #{tpu_custom_call.1} parent=1 // pred_check_branch
      %24 = sbr.rel (0) target = $region9
    $region8: #{tpu_custom_call.1} parent=1 // pred_region
      %s26 = ssub.s32 256, 256
      %27 = vsyncadd [#allocation5], %s26
      %s28 = sshll.u32 [#allocation4], 4
      %s29 = int_to_ptr.vmem [resolvable:$true] %s28
      %34 = dma.hbm_to_vmem [thread:$0]  %s1, 256, %s29, [#allocation5], 128, 128, 8
    $region9: #{tpu_custom_call.1} parent=1 // pred_fallthru
      _
    // Predicated region
    $region10: #{tpu_custom_call.1} parent=1 // pred_check
      _
    $region11: #{tpu_custom_call.1} parent=1 // pred_check_branch
      %36 = sbr.rel (0) target = $region13
    $region12: #{tpu_custom_call.1} parent=1 // pred_region
      _
    $region13: #{tpu_custom_call.1} parent=1 // pred_fallthru
      _
    // Predicated region
    $region14: #{tpu_custom_call.1} parent=1 // pred_check
      _
    $region15: #{tpu_custom_call.1} parent=1 // pred_check_branch
      %38 = sbr.rel (0) target = $region17
    $region16: #{tpu_custom_call.1} parent=1 // pred_region
      _
    $region17: #{tpu_custom_call.1} parent=1 // pred_fallthru
      _
    // Predicated region
    $region18: #{tpu_custom_call.1} parent=1 // pred_check
      _
    $region19: #{tpu_custom_call.1} parent=1 // pred_check_branch
      %40 = sbr.rel (0) target = $region21
    $region20: #{tpu_custom_call.1} parent=1 // pred_region
      _
    $region21: #{tpu_custom_call.1} parent=1 // pred_fallthru
      _
    // Predicated region
    $region22: #{tpu_custom_call.1} parent=1 // pred_check
      _
    $region23: #{tpu_custom_call.1} parent=1 // pred_check_branch
      %42 = sbr.rel (0) target = $region25
    $region24: #{tpu_custom_call.1} parent=1 // pred_region
      _
    $region25: #{tpu_custom_call.1} parent=1 // pred_fallthru
      _
    // Predicated region
    $region26: #{tpu_custom_call.1} parent=1 // pred_check
      _
    $region27: #{tpu_custom_call.1} parent=1 // pred_check_branch
      %44 = sbr.rel (0) target = $region29
    $region28: #{tpu_custom_call.1} parent=1 // pred_region
      %45 = dma.done [#allocation3], 128
    $region29: #{tpu_custom_call.1} parent=1 // pred_fallthru
      _
    // Predicated region
    $region30: #{tpu_custom_call.1} parent=1 // pred_check
      _
    $region31: #{tpu_custom_call.1} parent=1 // pred_check_branch
      %47 = sbr.rel (0) target = $region33
    $region32: #{tpu_custom_call.1} parent=1 // pred_region
      %48 = dma.done [#allocation5], 256
    $region33: #{tpu_custom_call.1} parent=1 // pred_fallthru
      _
    %v50 = vld [vmem:[#allocation2] sm:$0xff]
    %v51 = vpack.c.bf16 %v50, %v50
    %v52 = vld [vmem:[%s5] ss:$4 sm:$0x3]
    %v53 = vld [vmem:[%s5 + $0x1] sm:$0x1]
    %v54 = vld [vmem:[%s5 + $0x2] sm:$0x1]
    %v55 = vld [vmem:[%s5 + $0x3] sm:$0x1]
    %v56 = vld [vmem:[#allocation4] sm:$0xff]
    %v57 = vld [vmem:[#allocation4 + $0x8] sm:$0x77]
    %v59 = vlaneseq
    %v60 = vshrl.u32 %v59, 7
    %v61 = vsub.s32 0, %v60
    %v62 = vrot.slane %v52, %v61
    %v63 = vlaneseq
    %v64 = vshrl.u32 %v63, 7
    %v65 = vsub.s32 1, %v64
    %v66 = vrot.slane %v52, %v65
    %v71 = vunpack.c.l.b16 %v56
    %v72 = vunpack.c.h.b16 %v56
    %v73 = vunpack.c.l.b16 %v57
    %v74 = vunpack.c.h.b16 %v57
    %v75 = vpack.c.b16 %v73, %v71
    %v76 = vpack.c.b16 %v74, %v72
    %vm77 = vcmask 113664
    %v79 = vsel %vm77, %v51, 0
    %vm81 = vcmask 1046528
    %v83 = vsel %vm81, %v75, 0
    %v86 = vsel %vm81, %v76, 0
    %88 = vmatprep.subr.bf16.mxu0 0
    %89 = vmatpush1.bf16.msra.mxu0 0
    %90 = vmatprep.subr.bf16.mxu0 0
    %91 = vmatpush1.bf16.msra.mxu0 0
    %92 = vmatprep.subr.bf16.mxu0 0
    %93 = vmatpush1.bf16.msra.mxu0 0
    %94 = vmatprep.subr.bf16.mxu0 0
    %95 = vmatpush1.bf16.msra.mxu0 0
    %96 = vmatprep.subr.bf16.mxu0 0
    %97 = vmatpush1.bf16.msra.mxu0 0
    %98 = vmatprep.subr.bf16.mxu0 0
    %99 = vmatpush1.bf16.msra.mxu0 0
    %100 = vmatprep.subr.bf16.mxu0 0
    %101 = vmatpush1.bf16.msra.mxu0 0
    %102 = vmatprep.subr.bf16.mxu0 %v86
    %103 = vmatpush1.bf16.msra.mxu0 %v83
    %104 = vmatprep.subr.bf16.mxu0 0
    %105 = vmatpush2.bf16.msra.mxu0 0
    %106 = vmatprep.subr.bf16.mxu0 0
    %107 = vmatpush2.bf16.msra.mxu0 0
    %108 = vmatprep.subr.bf16.mxu0 0
    %109 = vmatpush2.bf16.msra.mxu0 0
    %110 = vmatprep.subr.bf16.mxu0 0
    %111 = vmatpush2.bf16.msra.mxu0 0
    %112 = vmatprep.subr.bf16.mxu0 0
    %113 = vmatpush2.bf16.msra.mxu0 0
    %114 = vmatprep.subr.bf16.mxu0 0
    %115 = vmatpush2.bf16.msra.mxu0 0
    %116 = vmatprep.subr.bf16.mxu0 0
    %117 = vmatpush2.bf16.msra.mxu0 0
    %118 = vmatprep.subr.bf16.mxu0 0
    %119 = vmatpush2.bf16.msra.mxu0 0
    %120 = vmatprep.mubr.bf16.mxu0 0
    %121 = vmatmul.mubr.bf16.gmra.mxu0 %v79
    %v122 = vpop.f32.mrf.mxu0
    %v123 = vadd.f32 %v62, %v122
    %v124 = vpop.f32.mrf.mxu0
    %v125 = vadd.f32 %v66, %v124
    %v126 = vpop.f32.mrf.mxu0
    %v127 = vpop.f32.mrf.mxu0
    %128 = vdwg.mxu0
    %v129 = vmax.f32 %v123, 0.0
    %v130 = vmax.f32 %v125, 0.0
    %v131 = vpack.c.bf16 %v129, %v129
    %v132 = vpack.c.bf16 %v130, %v130
    %v133 = vld [vmem:[%s2] sm:$0xf]
    %v134 = vld [vmem:[%s2 + $0x4] sm:$0xf]
    %v135 = vld [vmem:[%s2 + $0x8] sm:$0xf]
    %v136 = vld [vmem:[%s2 + $0xc] sm:$0xf]
    %v137 = vld [vmem:[%s2 + $0x10] sm:$0xf]
    %v138 = vld [vmem:[%s2 + $0x14] sm:$0xf]
    %v139 = vld [vmem:[%s2 + $0x18] sm:$0xf]
    %v140 = vld [vmem:[%s2 + $0x1c] sm:$0xf]
    %v141 = vld [vmem:[%s2 + $0x20] sm:$0xf]
    %v142 = vld [vmem:[%s2 + $0x24] sm:$0xf]
    %v143 = vld [vmem:[%s2 + $0x28] sm:$0xf]
    %v144 = vld [vmem:[%s2 + $0x2c] sm:$0xf]
    %v145 = vld [vmem:[%s2 + $0x30] sm:$0xf]
    %v146 = vld [vmem:[%s2 + $0x34] sm:$0xf]
    %v147 = vld [vmem:[%s2 + $0x38] sm:$0xf]
    %v148 = vld [vmem:[%s2 + $0x3c] sm:$0xf]
    %v149 = vld [vmem:[%s2 + $0x40] sm:$0xf]
    %v150 = vld [vmem:[%s2 + $0x44] sm:$0xf]
    %v151 = vld [vmem:[%s2 + $0x48] sm:$0xf]
    %v152 = vld [vmem:[%s2 + $0x4c] sm:$0xf]
    %v153 = vld [vmem:[%s2 + $0x50] sm:$0xf]
    %v154 = vld [vmem:[%s2 + $0x54] sm:$0xf]
    %v155 = vld [vmem:[%s2 + $0x58] sm:$0xf]
    %v156 = vld [vmem:[%s2 + $0x5c] sm:$0xf]
    %v157 = vld [vmem:[%s2 + $0x60] sm:$0xf]
    %v158 = vld [vmem:[%s2 + $0x64] sm:$0xf]
    %v159 = vld [vmem:[%s2 + $0x68] sm:$0xf]
    %v160 = vld [vmem:[%s2 + $0x6c] sm:$0xf]
    %v161 = vld [vmem:[%s2 + $0x70] sm:$0xf]
    %v162 = vld [vmem:[%s2 + $0x74] sm:$0xf]
    %v163 = vld [vmem:[%s2 + $0x78] sm:$0xf]
    %v164 = vld [vmem:[%s2 + $0x7c] sm:$0xf]
    %v165 = vlaneseq
    %v166 = vshrl.u32 %v165, 7
    %v167 = vsub.s32 0, %v166
    %v168 = vrot.slane %v53, %v167
    %v201 = vunpack.c.l.b16 %v133
    %v202 = vunpack.c.l.b16 %v134
    %v203 = vunpack.c.l.b16 %v135
    %v204 = vunpack.c.l.b16 %v136
    %v205 = vunpack.c.l.b16 %v137
    %v206 = vunpack.c.l.b16 %v138
    %v207 = vunpack.c.l.b16 %v139
    %v208 = vunpack.c.l.b16 %v140
    %v209 = vunpack.c.l.b16 %v141
    %v210 = vunpack.c.l.b16 %v142
    %v211 = vunpack.c.l.b16 %v143
    %v212 = vunpack.c.l.b16 %v144
    %v213 = vunpack.c.l.b16 %v145
    %v214 = vunpack.c.l.b16 %v146
    %v215 = vunpack.c.l.b16 %v147
    %v216 = vunpack.c.l.b16 %v148
    %v217 = vunpack.c.l.b16 %v149
    %v218 = vunpack.c.l.b16 %v150
    %v219 = vunpack.c.l.b16 %v151
    %v220 = vunpack.c.l.b16 %v152
    %v221 = vunpack.c.l.b16 %v153
    %v222 = vunpack.c.l.b16 %v154
    %v223 = vunpack.c.l.b16 %v155
    %v224 = vunpack.c.l.b16 %v156
    %v225 = vunpack.c.l.b16 %v157
    %v226 = vunpack.c.l.b16 %v158
    %v227 = vunpack.c.l.b16 %v159
    %v228 = vunpack.c.l.b16 %v160
    %v229 = vunpack.c.l.b16 %v161
    %v230 = vunpack.c.l.b16 %v162
    %v231 = vunpack.c.l.b16 %v163
    %v232 = vunpack.c.l.b16 %v164
    %v233 = vpack.c.b16 %v202, %v201
    %v234 = vpack.c.b16 %v204, %v203
    %v235 = vpack.c.b16 %v206, %v205
    %v236 = vpack.c.b16 %v208, %v207
    %v237 = vpack.c.b16 %v210, %v209
    %v238 = vpack.c.b16 %v212, %v211
    %v239 = vpack.c.b16 %v214, %v213
    %v240 = vpack.c.b16 %v216, %v215
    %v241 = vpack.c.b16 %v218, %v217
    %v242 = vpack.c.b16 %v220, %v219
    %v243 = vpack.c.b16 %v222, %v221
    %v244 = vpack.c.b16 %v224, %v223
    %v245 = vpack.c.b16 %v226, %v225
    %v246 = vpack.c.b16 %v228, %v227
    %v247 = vpack.c.b16 %v230, %v229
    %v248 = vpack.c.b16 %v232, %v231
    %265 = vmatprep.subr.bf16.mxu0 0
    %266 = vmatpush1.bf16.msra.mxu0 %v240
    %267 = vmatprep.subr.bf16.mxu0 0
    %268 = vmatpush1.bf16.msra.mxu0 %v239
    %269 = vmatprep.subr.bf16.mxu0 0
    %270 = vmatpush1.bf16.msra.mxu0 %v238
    %271 = vmatprep.subr.bf16.mxu0 0
    %272 = vmatpush1.bf16.msra.mxu0 %v237
    %273 = vmatprep.subr.bf16.mxu0 0
    %274 = vmatpush1.bf16.msra.mxu0 %v236
    %275 = vmatprep.subr.bf16.mxu0 0
    %276 = vmatpush1.bf16.msra.mxu0 %v235
    %277 = vmatprep.subr.bf16.mxu0 0
    %278 = vmatpush1.bf16.msra.mxu0 %v234
    %279 = vmatprep.subr.bf16.mxu0 0
    %280 = vmatpush1.bf16.msra.mxu0 %v233
    %281 = vmatprep.subr.bf16.mxu0 0
    %282 = vmatpush2.bf16.msra.mxu0 %v248
    %283 = vmatprep.subr.bf16.mxu0 0
    %284 = vmatpush2.bf16.msra.mxu0 %v247
    %285 = vmatprep.subr.bf16.mxu0 0
    %286 = vmatpush2.bf16.msra.mxu0 %v246
    %287 = vmatprep.subr.bf16.mxu0 0
    %288 = vmatpush2.bf16.msra.mxu0 %v245
    %289 = vmatprep.subr.bf16.mxu0 0
    %290 = vmatpush2.bf16.msra.mxu0 %v244
    %291 = vmatprep.subr.bf16.mxu0 0
    %292 = vmatpush2.bf16.msra.mxu0 %v243
    %293 = vmatprep.subr.bf16.mxu0 0
    %294 = vmatpush2.bf16.msra.mxu0 %v242
    %295 = vmatprep.subr.bf16.mxu0 0
    %296 = vmatpush2.bf16.msra.mxu0 %v241
    %297 = vmatprep.mubr.bf16.mxu0 %v132
    %298 = vmatmul.mubr.bf16.gmra.mxu0 %v131
    %v299 = vpop.f32.mrf.mxu0
    %v300 = vadd.f32 %v168, %v299
    %v301 = vpop.f32.mrf.mxu0
    %v302 = vpop.f32.mrf.mxu0
    %v303 = vpop.f32.mrf.mxu0
    %304 = vdwg.mxu0
    %v305 = vmax.f32 %v300, 0.0
    %v306 = vpack.c.bf16 %v305, %v305
    %v307 = vld [vmem:[%s3] sm:$0xf]
    %v308 = vld [vmem:[%s3 + $0x4] sm:$0xf]
    %v309 = vld [vmem:[%s3 + $0x8] sm:$0xf]
    %v310 = vld [vmem:[%s3 + $0xc] sm:$0xf]
    %v311 = vld [vmem:[%s3 + $0x10] sm:$0xf]
    %v312 = vld [vmem:[%s3 + $0x14] sm:$0xf]
    %v313 = vld [vmem:[%s3 + $0x18] sm:$0xf]
    %v314 = vld [vmem:[%s3 + $0x1c] sm:$0xf]
    %v315 = vld [vmem:[%s3 + $0x20] sm:$0xf]
    %v316 = vld [vmem:[%s3 + $0x24] sm:$0xf]
    %v317 = vld [vmem:[%s3 + $0x28] sm:$0xf]
    %v318 = vld [vmem:[%s3 + $0x2c] sm:$0xf]
    %v319 = vld [vmem:[%s3 + $0x30] sm:$0xf]
    %v320 = vld [vmem:[%s3 + $0x34] sm:$0xf]
    %v321 = vld [vmem:[%s3 + $0x38] sm:$0xf]
    %v322 = vld [vmem:[%s3 + $0x3c] sm:$0xf]
    %v323 = vlaneseq
    %v324 = vshrl.u32 %v323, 7
    %v325 = vsub.s32 0, %v324
    %v326 = vrot.slane %v54, %v325
    %v343 = vunpack.c.l.b16 %v307
    %v344 = vunpack.c.l.b16 %v308
    %v345 = vunpack.c.l.b16 %v309
    %v346 = vunpack.c.l.b16 %v310
    %v347 = vunpack.c.l.b16 %v311
    %v348 = vunpack.c.l.b16 %v312
    %v349 = vunpack.c.l.b16 %v313
    %v350 = vunpack.c.l.b16 %v314
    %v351 = vunpack.c.l.b16 %v315
    %v352 = vunpack.c.l.b16 %v316
    %v353 = vunpack.c.l.b16 %v317
    %v354 = vunpack.c.l.b16 %v318
    %v355 = vunpack.c.l.b16 %v319
    %v356 = vunpack.c.l.b16 %v320
    %v357 = vunpack.c.l.b16 %v321
    %v358 = vunpack.c.l.b16 %v322
    %v359 = vpack.c.b16 %v344, %v343
    %v360 = vpack.c.b16 %v346, %v345
    %v361 = vpack.c.b16 %v348, %v347
    %v362 = vpack.c.b16 %v350, %v349
    %v363 = vpack.c.b16 %v352, %v351
    %v364 = vpack.c.b16 %v354, %v353
    %v365 = vpack.c.b16 %v356, %v355
    %v366 = vpack.c.b16 %v358, %v357
    %375 = vmatprep.subr.bf16.mxu0 0
    %376 = vmatpush1.bf16.msra.mxu0 %v366
    %377 = vmatprep.subr.bf16.mxu0 0
    %378 = vmatpush1.bf16.msra.mxu0 %v365
    %379 = vmatprep.subr.bf16.mxu0 0
    %380 = vmatpush1.bf16.msra.mxu0 %v364
    %381 = vmatprep.subr.bf16.mxu0 0
    %382 = vmatpush1.bf16.msra.mxu0 %v363
    %383 = vmatprep.subr.bf16.mxu0 0
    %384 = vmatpush1.bf16.msra.mxu0 %v362
    %385 = vmatprep.subr.bf16.mxu0 0
    %386 = vmatpush1.bf16.msra.mxu0 %v361
    %387 = vmatprep.subr.bf16.mxu0 0
    %388 = vmatpush1.bf16.msra.mxu0 %v360
    %389 = vmatprep.subr.bf16.mxu0 0
    %390 = vmatpush1.bf16.msra.mxu0 %v359
    %391 = vmatprep.subr.bf16.mxu0 0
    %392 = vmatpush2.bf16.msra.mxu0 0
    %393 = vmatprep.subr.bf16.mxu0 0
    %394 = vmatpush2.bf16.msra.mxu0 0
    %395 = vmatprep.subr.bf16.mxu0 0
    %396 = vmatpush2.bf16.msra.mxu0 0
    %397 = vmatprep.subr.bf16.mxu0 0
    %398 = vmatpush2.bf16.msra.mxu0 0
    %399 = vmatprep.subr.bf16.mxu0 0
    %400 = vmatpush2.bf16.msra.mxu0 0
    %401 = vmatprep.subr.bf16.mxu0 0
    %402 = vmatpush2.bf16.msra.mxu0 0
    %403 = vmatprep.subr.bf16.mxu0 0
    %404 = vmatpush2.bf16.msra.mxu0 0
    %405 = vmatprep.subr.bf16.mxu0 0
    %406 = vmatpush2.bf16.msra.mxu0 0
    %407 = vmatprep.mubr.bf16.mxu0 0
    %408 = vmatmul.mubr.bf16.gmra.mxu0 %v306
    %v409 = vpop.f32.mrf.mxu0
    %v410 = vadd.f32 %v326, %v409
    %v411 = vpop.f32.mrf.mxu0
    %v412 = vpop.f32.mrf.mxu0
    %v413 = vpop.f32.mrf.mxu0
    %414 = vdwg.mxu0
    %v415 = vmax.f32 %v410, 0.0
    %v416 = vpack.c.bf16 %v415, %v415
    %v417 = vld [vmem:[%s4] sm:$0xf]
    %v418 = vld [vmem:[%s4 + $0x4] sm:$0xf]
    %v419 = vld [vmem:[%s4 + $0x8] sm:$0xf]
    %v420 = vld [vmem:[%s4 + $0xc] sm:$0xf]
    %v421 = vld [vmem:[%s4 + $0x10] sm:$0xf]
    %v422 = vld [vmem:[%s4 + $0x14] sm:$0xf]
    %v423 = vld [vmem:[%s4 + $0x18] sm:$0xf]
    %v424 = vld [vmem:[%s4 + $0x1c] sm:$0xf]
    %v425 = vlaneseq
    %v426 = vshrl.u32 %v425, 7
    %v427 = vsub.s32 0, %v426
    %v428 = vrot.slane %v55, %v427
    %v437 = vunpack.c.l.b16 %v417
    %v438 = vunpack.c.l.b16 %v418
    %v439 = vunpack.c.l.b16 %v419
    %v440 = vunpack.c.l.b16 %v420
    %v441 = vunpack.c.l.b16 %v421
    %v442 = vunpack.c.l.b16 %v422
    %v443 = vunpack.c.l.b16 %v423
    %v444 = vunpack.c.l.b16 %v424
    %v445 = vpack.c.b16 %v438, %v437
    %v446 = vpack.c.b16 %v440, %v439
    %v447 = vpack.c.b16 %v442, %v441
    %v448 = vpack.c.b16 %v444, %v443
    %vm453 = vcmask 523264
    %v455 = vsel %vm453, %v416, 0
    %457 = vmatprep.subr.bf16.mxu0 0
    %458 = vmatpush1.bf16.msra.mxu0 0
    %459 = vmatprep.subr.bf16.mxu0 0
    %460 = vmatpush1.bf16.msra.mxu0 0
    %461 = vmatprep.subr.bf16.mxu0 0
    %462 = vmatpush1.bf16.msra.mxu0 0
    %463 = vmatprep.subr.bf16.mxu0 0
    %464 = vmatpush1.bf16.msra.mxu0 0
    %465 = vmatprep.subr.bf16.mxu0 0
    %466 = vmatpush1.bf16.msra.mxu0 %v448
    %467 = vmatprep.subr.bf16.mxu0 0
    %468 = vmatpush1.bf16.msra.mxu0 %v447
    %469 = vmatprep.subr.bf16.mxu0 0
    %470 = vmatpush1.bf16.msra.mxu0 %v446
    %471 = vmatprep.subr.bf16.mxu0 0
    %472 = vmatpush1.bf16.msra.mxu0 %v445
    %473 = vmatprep.subr.bf16.mxu0 0
    %474 = vmatpush2.bf16.msra.mxu0 0
    %475 = vmatprep.subr.bf16.mxu0 0
    %476 = vmatpush2.bf16.msra.mxu0 0
    %477 = vmatprep.subr.bf16.mxu0 0
    %478 = vmatpush2.bf16.msra.mxu0 0
    %479 = vmatprep.subr.bf16.mxu0 0
    %480 = vmatpush2.bf16.msra.mxu0 0
    %481 = vmatprep.subr.bf16.mxu0 0
    %482 = vmatpush2.bf16.msra.mxu0 0
    %483 = vmatprep.subr.bf16.mxu0 0
    %484 = vmatpush2.bf16.msra.mxu0 0
    %485 = vmatprep.subr.bf16.mxu0 0
    %486 = vmatpush2.bf16.msra.mxu0 0
    %487 = vmatprep.subr.bf16.mxu0 0
    %488 = vmatpush2.bf16.msra.mxu0 0
    %489 = vmatprep.mubr.bf16.mxu0 0
    %490 = vmatmul.mubr.bf16.gmra.mxu0 %v455
    %v491 = vpop.f32.mrf.mxu0
    %v492 = vadd.f32 %v428, %v491
    %v493 = vpop.f32.mrf.mxu0
    %v494 = vpop.f32.mrf.mxu0
    %v495 = vpop.f32.mrf.mxu0
    %496 = vdwg.mxu0
    %vm497 = vcmask 31744
    %498 = vst.msk [vmem:[%s6] sm:$0xff] %vm497, %v492
    // Predicated region
    $region34: #{tpu_custom_call.1} parent=1 // pred_check
      _
    $region35: #{tpu_custom_call.1} parent=1 // pred_check_branch
      %500 = sbr.rel (0) target = $region37
    $region36: #{tpu_custom_call.1} parent=1 // pred_region
      _
    $region37: #{tpu_custom_call.1} parent=1 // pred_fallthru
      _
    // Predicated region
    $region38: #{tpu_custom_call.1} parent=1 // pred_check
      _
    $region39: #{tpu_custom_call.1} parent=1 // pred_check_branch
      %502 = sbr.rel (0) target = $region41
    $region40: #{tpu_custom_call.1} parent=1 // pred_region
      _
    $region41: #{tpu_custom_call.1} parent=1 // pred_fallthru
      _
    %503 = vsyncpa [#allocation3], 1
    %504 = vsyncpa [#allocation5], 1

</llo_original>
